<compile_context>
chip_gen: v6e
topology: v6e:2x2x1
jax: 0.10.0
libtpu: 0.0.40
codegen_flags: <defaults>
</compile_context>

<pallas_src>
import functools

import jax
import jax.numpy as jnp
from jax import lax
from jax.experimental import pallas as pl
from jax.experimental.pallas import tpu as pltpu

LANES = 128
SUBLANES = 8
CHUNK_ROWS = 512        # inner-loop chunk: 512x128 f32 temporaries ~= 256 KiB
MAX_BLOCK_ROWS = 4096   # 2 MiB / f32 input tile; 2 inputs x 2 buffers = 8 MiB
PAD_SENTINEL = -1.0e4   # finite in f16/bf16; sigmoid/softplus of it are exactly 0


def _round_up(n, m):
    return ((n + m - 1) // m) * m


def _dice_bce_partial_kernel(x_ref, t_ref, out_ref, *, total_rows, block_rows,
                             chunk_rows, has_overhang):
    """Writes this block's partial sums to out_ref[0] (shape (3, 8, 128)):
       [0] sum(p*t)   [1] sum(p) + sum(t)   [2] sum(bce)."""
    num_chunks = block_rows // chunk_rows

    def chunk_body(c, carry, masked, row_local):
        acc_pt, acc_s, acc_bce = carry
        start = pl.multiple_of(c * chunk_rows, chunk_rows)
        x = x_ref[pl.ds(start, chunk_rows), :].astype(jnp.float32)
        t = t_ref[pl.ds(start, chunk_rows), :].astype(jnp.float32)

        if masked:
            # Row-granular validity mask.  Masking the *inputs* (sentinel x,
            # zero t) makes every downstream contribution exactly zero, so no
            # per-result selects are needed.  Only traced for the last block.
            grow = pl.program_id(0) * block_rows + c * chunk_rows + row_local
            valid = grow < total_rows
            x = jnp.where(valid, x, jnp.float32(PAD_SENTINEL))
            t = jnp.where(valid, t, jnp.float32(0.0))

        # Shared transcendental chain (one exp + one log per element):
        #   e        = exp(-|x|)
        #   softplus = max(x, 0) + log1p(e)          == log(1 + exp(x))
        #   sigmoid  = 1/(1+e)       if x >= 0
        #            = 1 - 1/(1+e)   if x <  0
        e = jnp.exp(-jnp.abs(x))
        softplus = jnp.maximum(x, 0.0) + jnp.log1p(e)
        r = 1.0 / (1.0 + e)              # exact divide (not approx reciprocal)
        p = jnp.where(x >= 0.0, r, 1.0 - r)

        pt = p * t                       # -> intersection
        s = p + t                        # -> sum(p) + sum(t)
        bce = softplus - t * x           # -(t log p + (1-t) log(1-p)) from logits

        # Tile -> one (8, 128) vreg per quantity: whole-vreg adds only (VPU),
        # no cross-lane work in the steady state.
        def vreg_sum(v):
            return jnp.sum(
                v.reshape(chunk_rows // SUBLANES, SUBLANES, LANES), axis=0)

        return (acc_pt + vreg_sum(pt),
                acc_s + vreg_sum(s),
                acc_bce + vreg_sum(bce))

    def compute_and_store(masked):
        row_local = (lax.broadcasted_iota(jnp.int32, (chunk_rows, LANES), 0)
                     if masked else None)
        zero = jnp.zeros((SUBLANES, LANES), jnp.float32)
        pt_s, s_s, bce_s = lax.fori_loop(
            0, num_chunks,
            lambda c, carry: chunk_body(c, carry, masked, row_local),
            (zero, zero, zero))
        out_ref[0, 0] = pt_s
        out_ref[0, 1] = s_s
        out_ref[0, 2] = bce_s

    if has_overhang:
        pid = pl.program_id(0)
        last = pl.num_programs(0) - 1

        @pl.when(pid == last)
        def _():
            compute_and_store(True)

        @pl.when(pid != last)
        def _():
            compute_and_store(False)
    else:
        compute_and_store(False)


def dice_bce_loss(inputs, targets, smooth=1.0):
    """inputs: raw logits (any shape/dtype); targets: same shape (any float/int
    dtype -- streamed in native width, upcast to f32 in VMEM). Scalar f32."""
    n_valid = int(inputs.size)
    x = inputs.reshape(-1)
    t = targets.reshape(-1)

    # Lane padding only (rare: only when numel % 128 != 0).  Sentinel padding
    # contributes exactly zero in-kernel, so no per-element mask is needed.
    n_lane = _round_up(n_valid, LANES)
    pad = n_lane - n_valid
    if pad:
        x = jnp.pad(x, (0, pad), constant_values=PAD_SENTINEL)
        t = jnp.pad(t, (0, pad), constant_values=0)
    rows = n_lane // LANES
    x = x.reshape(rows, LANES)
    t = t.reshape(rows, LANES)

    # Block selection: big blocks (2 MiB/input) with an inner chunk loop;
    # medium inputs split into ~2 equal blocks so both v7x TensorCores work.
    rows8 = _round_up(rows, SUBLANES)
    if rows8 <= 2 * CHUNK_ROWS:
        block_rows = rows8
    elif rows8 <= 2 * MAX_BLOCK_ROWS:
        block_rows = min(MAX_BLOCK_ROWS,
                         _round_up(pl.cdiv(rows8, 2), CHUNK_ROWS))
    else:
        block_rows = MAX_BLOCK_ROWS
    grid = pl.cdiv(rows, block_rows)
    chunk_rows = CHUNK_ROWS if block_rows % CHUNK_ROWS == 0 else block_rows
    has_overhang = (grid * block_rows) != rows

    kernel = functools.partial(
        _dice_bce_partial_kernel,
        total_rows=rows, block_rows=block_rows, chunk_rows=chunk_rows,
        has_overhang=has_overhang)

    partials = pl.pallas_call(
        kernel,
        out_shape=jax.ShapeDtypeStruct((grid, 3, SUBLANES, LANES), jnp.float32),
        grid_spec=pltpu.PrefetchScalarGridSpec(
            num_scalar_prefetch=0,
            grid=(grid,),
            in_specs=[
                pl.BlockSpec((block_rows, LANES), lambda i: (i, 0)),
                pl.BlockSpec((block_rows, LANES), lambda i: (i, 0)),
            ],
            out_specs=pl.BlockSpec((1, 3, SUBLANES, LANES),
                                   lambda i: (i, 0, 0, 0)),
        ),
        compiler_params=pltpu.CompilerParams(
            # Independent per-block partials -> grid shards across both
            # TensorCores on v7x; harmless on single-TC v5e/v6e.
            dimension_semantics=("parallel",),
        ),
    )(x, t)

    # Tiny final combine in plain JAX (partials are ~0.1% of streamed bytes).
    sums = jnp.sum(partials, axis=(0, 2, 3))               # (3,)
    inter, sum_pt, sum_bce = sums[0], sums[1], sums[2]
    dice_loss = 1.0 - (2.0 * inter + smooth) / (sum_pt + smooth)
    bce_mean = sum_bce / jnp.float32(n_valid)
    return (0.5 * bce_mean + 0.5 * dice_loss).astype(jnp.float32)


if __name__ == "__main__":
    key = jax.random.PRNGKey(0)
    k1, k2 = jax.random.split(key)
    # Segmentation-style NCHW shapes: (batch=2, channels=4, H=16, W=16).
    logits = jax.random.normal(k1, (2, 4, 16, 16), dtype=jnp.float32)
    targets = (jax.random.uniform(k2, (2, 4, 16, 16)) > 0.5).astype(jnp.float32)

    loss = dice_bce_loss(logits, targets, smooth=1.0)
    jax.block_until_ready(loss)

    # Pure-JAX reference of the PyTorch module's math.
    p = jax.nn.sigmoid(logits.reshape(-1).astype(jnp.float32))
    tf = targets.reshape(-1).astype(jnp.float32)
    inter = jnp.sum(p * tf)
    dice = 1.0 - (2.0 * inter + 1.0) / (jnp.sum(p) + jnp.sum(tf) + 1.0)
    bce = -jnp.mean(tf * jnp.log(p) + (1.0 - tf) * jnp.log(1.0 - p))
    ref = 0.5 * bce + 0.5 * dice
    assert jnp.allclose(loss, ref, atol=1e-5, rtol=1e-5), (loss, ref)

    print("KERNEL_OK")
</pallas_src>

<mosaic_0001>
module attributes {stable_mosaic.version = 11 : i64} {
  func.func @_dice_bce_partial_kernel(%arg0: i32, %arg1: memref<16x128xf32, #tpu.memory_space<vmem>>, %arg2: memref<16x128xf32, #tpu.memory_space<vmem>>, %arg3: memref<1x3x8x128xf32, #tpu.memory_space<vmem>>) attributes {dimension_semantics = [#tpu.dimension_semantics<parallel>], iteration_bounds = array<i64: 1>, scalar_prefetch = 0 : i64, scratch_operands = 0 : i64, tpu.core_type = #tpu.core_type<tc>, window_params = [{transform_indices = @transform_0, window_bounds = array<i64: 16, 128>}, {transform_indices = @transform_1, window_bounds = array<i64: 16, 128>}, {transform_indices = @transform_2, window_bounds = array<i64: 1, 3, 8, 128>}]} {
    %cst = arith.constant 0.000000e+00 : f32
    %0 = vector.broadcast %cst : f32 to vector<8x128xf32>
    %c0_i32 = arith.constant 0 : i32
    %c16_i32 = arith.constant 16 : i32
    %1 = arith.muli %c0_i32, %c16_i32 : i32
    %2 = tpu.assume_multiple %1, 16 : i32
    %3 = arith.index_cast %2 : i32 to index
    %c0 = arith.constant 0 : index
    %4 = vector.load %arg1[%3, %c0] : memref<16x128xf32, #tpu.memory_space<vmem>>, vector<16x128xf32>
    %5 = arith.index_cast %2 : i32 to index
    %c0_0 = arith.constant 0 : index
    %6 = vector.load %arg2[%5, %c0_0] : memref<16x128xf32, #tpu.memory_space<vmem>>, vector<16x128xf32>
    %7 = math.absf %4 : vector<16x128xf32>
    %cst_1 = arith.constant 0.000000e+00 : f32
    %8 = vector.broadcast %cst_1 : f32 to vector<16x128xf32>
    %9 = arith.subf %8, %7 : vector<16x128xf32>
    %10 = math.exp %9 : vector<16x128xf32>
    %cst_2 = arith.constant 0.000000e+00 : f32
    %11 = vector.broadcast %cst_2 : f32 to vector<16x128xf32>
    %12 = arith.maximumf %4, %11 : vector<16x128xf32>
    %13 = math.log1p %10 : vector<16x128xf32>
    %14 = arith.addf %12, %13 : vector<16x128xf32>
    %cst_3 = arith.constant 1.000000e+00 : f32
    %15 = vector.broadcast %cst_3 : f32 to vector<16x128xf32>
    %16 = arith.addf %15, %10 : vector<16x128xf32>
    %cst_4 = arith.constant 1.000000e+00 : f32
    %17 = vector.broadcast %cst_4 : f32 to vector<16x128xf32>
    %18 = arith.divf %17, %16 : vector<16x128xf32>
    %cst_5 = arith.constant 0.000000e+00 : f32
    %19 = vector.broadcast %cst_5 : f32 to vector<16x128xf32>
    %20 = arith.cmpf oge, %4, %19 : vector<16x128xf32>
    %cst_6 = arith.constant 1.000000e+00 : f32
    %21 = vector.broadcast %cst_6 : f32 to vector<16x128xf32>
    %22 = arith.subf %21, %18 : vector<16x128xf32>
    %23 = arith.select %20, %18, %22 : vector<16x128xi1>, vector<16x128xf32>
    %24 = arith.mulf %23, %6 : vector<16x128xf32>
    %25 = arith.addf %23, %6 : vector<16x128xf32>
    %26 = arith.mulf %6, %4 : vector<16x128xf32>
    %27 = arith.subf %14, %26 : vector<16x128xf32>
    %28 = vector.shape_cast %24 : vector<16x128xf32> to vector<2x8x128xf32>
    %cst_7 = arith.constant dense<0.000000e+00> : vector<8x128xf32>
    %29 = vector.multi_reduction <add>, %28, %cst_7 [0] : vector<2x8x128xf32> to vector<8x128xf32>
    %30 = arith.addf %0, %29 : vector<8x128xf32>
    %31 = vector.shape_cast %25 : vector<16x128xf32> to vector<2x8x128xf32>
    %cst_8 = arith.constant dense<0.000000e+00> : vector<8x128xf32>
    %32 = vector.multi_reduction <add>, %31, %cst_8 [0] : vector<2x8x128xf32> to vector<8x128xf32>
    %33 = arith.addf %0, %32 : vector<8x128xf32>
    %34 = vector.shape_cast %27 : vector<16x128xf32> to vector<2x8x128xf32>
    %cst_9 = arith.constant dense<0.000000e+00> : vector<8x128xf32>
    %35 = vector.multi_reduction <add>, %34, %cst_9 [0] : vector<2x8x128xf32> to vector<8x128xf32>
    %36 = arith.addf %0, %35 : vector<8x128xf32>
    %c1_i32 = arith.constant 1 : i32
    %c0_10 = arith.constant 0 : index
    %c0_11 = arith.constant 0 : index
    %c0_12 = arith.constant 0 : index
    %c0_13 = arith.constant 0 : index
    %37 = vector.load %arg3[%c0_10, %c0_11, %c0_12, %c0_13] : memref<1x3x8x128xf32, #tpu.memory_space<vmem>>, vector<1x1x8x128xf32>
    %38 = vector.shape_cast %37 : vector<1x1x8x128xf32> to vector<8x128xf32>
    %39 = vector.shape_cast %30 : vector<8x128xf32> to vector<1x1x8x128xf32>
    tpu.vector_store %arg3[%c0_10, %c0_11, %c0_12, %c0_13], %39 {strides = array<i32>} : memref<1x3x8x128xf32, #tpu.memory_space<vmem>>, vector<1x1x8x128xf32>,
    %c0_14 = arith.constant 0 : index
    %c1 = arith.constant 1 : index
    %c0_15 = arith.constant 0 : index
    %c0_16 = arith.constant 0 : index
    %40 = vector.load %arg3[%c0_14, %c1, %c0_15, %c0_16] : memref<1x3x8x128xf32, #tpu.memory_space<vmem>>, vector<1x1x8x128xf32>
    %41 = vector.shape_cast %40 : vector<1x1x8x128xf32> to vector<8x128xf32>
    %42 = vector.shape_cast %33 : vector<8x128xf32> to vector<1x1x8x128xf32>
    tpu.vector_store %arg3[%c0_14, %c1, %c0_15, %c0_16], %42 {strides = array<i32>} : memref<1x3x8x128xf32, #tpu.memory_space<vmem>>, vector<1x1x8x128xf32>,
    %c0_17 = arith.constant 0 : index
    %c2 = arith.constant 2 : index
    %c0_18 = arith.constant 0 : index
    %c0_19 = arith.constant 0 : index
    %43 = vector.load %arg3[%c0_17, %c2, %c0_18, %c0_19] : memref<1x3x8x128xf32, #tpu.memory_space<vmem>>, vector<1x1x8x128xf32>
    %44 = vector.shape_cast %43 : vector<1x1x8x128xf32> to vector<8x128xf32>
    %45 = vector.shape_cast %36 : vector<8x128xf32> to vector<1x1x8x128xf32>
    tpu.vector_store %arg3[%c0_17, %c2, %c0_18, %c0_19], %45 {strides = array<i32>} : memref<1x3x8x128xf32, #tpu.memory_space<vmem>>, vector<1x1x8x128xf32>,
    return
  }
  func.func @transform_0(%arg0: i32) -> (i32, i32) {
    %c0_i32 = arith.constant 0 : i32
    %c0_i32_0 = arith.constant 0 : i32
    return %arg0, %c0_i32 : i32, i32
  }
  func.func @transform_1(%arg0: i32) -> (i32, i32) {
    %c0_i32 = arith.constant 0 : i32
    %c0_i32_0 = arith.constant 0 : i32
    return %arg0, %c0_i32 : i32, i32
  }
  func.func @transform_2(%arg0: i32) -> (i32, i32, i32, i32) {
    %c0_i32 = arith.constant 0 : i32
    %c0_i32_0 = arith.constant 0 : i32
    %c0_i32_1 = arith.constant 0 : i32
    %c0_i32_2 = arith.constant 0 : i32
    return %arg0, %c0_i32, %c0_i32_0, %c0_i32_1 : i32, i32, i32, i32
  }
}

</mosaic_0001>

<llo_original>
// kernel: tpu_custom_call.1
$region0: #{tpu_custom_call.1}
  #allocation0 [shape = 'u32[]', space=smem, size = 0x4, offset = 0x4, fixed_abs, tag = 'smem constant byte address 0x4 - core index']
  #allocation1 [shape = 'u32[144,128]{1,0:T(1,128)}', space=vmem, size = 0x12000, scoped, tag = 'internal scratch']
  %s0 = inlined_call_operand.hbm [shape: f32[16,128], index: 0, kind: input, shape index: {}]
  %s1 = inlined_call_operand.hbm [shape: f32[16,128], index: 1, kind: input, shape index: {}]
  %s2 = inlined_call_operand.hbm [shape: f32[1,3,8,128], index: 2, kind: output, shape index: {}]
  %s3 = sld [smem:[#allocation0]]
  $region26: #{tpu_custom_call.1} parent=0
    _
  %s5 = ssub.s32 1, %s3
  %s6 = scalar_select 0, %s5, %s3
  $region1: #{tpu_custom_call.1} parent=0
    #allocation2 [shape = 'u8[8192]{0}', space=vmem, size = 0x2000, scoped, tag = 'input window, operand 0, single buffered']
    #allocation3 [shape = 's32[1]{0}', space=sflag, size = 0x4, scoped, tag = 'scoped memory for tpu_custom_call.1']
    #allocation4 [shape = 's32[1]{0}', space=sflag, size = 0x4, scoped, tag = 'scoped memory for tpu_custom_call.1']
    #allocation5 [shape = 'u8[8192]{0}', space=vmem, size = 0x2000, scoped, tag = 'input window, operand 1, single buffered']
    #allocation6 [shape = 's32[1]{0}', space=sflag, size = 0x4, scoped, tag = 'scoped memory for tpu_custom_call.1']
    #allocation7 [shape = 'u8[12288]{0}', space=vmem, size = 0x3000, scoped, tag = 'output window, operand 0, single buffered']
    %7 = vsyncpa [#allocation3], 0
    %8 = vsyncpa [#allocation6], 0
    %9 = vsyncpa [#allocation4], 0
    // Predicated region
    $region2: #{tpu_custom_call.1} parent=1 // pred_check
      _
    $region3: #{tpu_custom_call.1} parent=1 // pred_check_branch
      %11 = sbr.rel (0) target = $region5
    $region4: #{tpu_custom_call.1} parent=1 // pred_region
      %s13 = ssub.s32 256, 256
      %14 = vsyncadd [#allocation3], %s13
      %s15 = sshll.u32 [#allocation2], 4
      %s16 = int_to_ptr.vmem [resolvable:$true] %s15
      %21 = dma.hbm_to_vmem [thread:$0]  %s0, 256, %s16, [#allocation3], 128, 128, 8
    $region5: #{tpu_custom_call.1} parent=1 // pred_fallthru
      _
    // Predicated region
    $region6: #{tpu_custom_call.1} parent=1 // pred_check
      _
    $region7: #{tpu_custom_call.1} parent=1 // pred_check_branch
      %23 = sbr.rel (0) target = $region9
    $region8: #{tpu_custom_call.1} parent=1 // pred_region
      %s25 = ssub.s32 256, 256
      %26 = vsyncadd [#allocation6], %s25
      %s27 = sshll.u32 [#allocation5], 4
      %s28 = int_to_ptr.vmem [resolvable:$true] %s27
      %33 = dma.hbm_to_vmem [thread:$0]  %s1, 256, %s28, [#allocation6], 128, 128, 8
    $region9: #{tpu_custom_call.1} parent=1 // pred_fallthru
      _
    // Predicated region
    $region10: #{tpu_custom_call.1} parent=1 // pred_check
      _
    $region11: #{tpu_custom_call.1} parent=1 // pred_check_branch
      %35 = sbr.rel (0) target = $region13
    $region12: #{tpu_custom_call.1} parent=1 // pred_region
      %36 = dma.done [#allocation3], 256
    $region13: #{tpu_custom_call.1} parent=1 // pred_fallthru
      _
    // Predicated region
    $region14: #{tpu_custom_call.1} parent=1 // pred_check
      _
    $region15: #{tpu_custom_call.1} parent=1 // pred_check_branch
      %38 = sbr.rel (0) target = $region17
    $region16: #{tpu_custom_call.1} parent=1 // pred_region
      %39 = dma.done [#allocation6], 256
    $region17: #{tpu_custom_call.1} parent=1 // pred_fallthru
      _
    %v40 = vld [vmem:[#allocation2] sm:$0xff]
    %v41 = vld [vmem:[#allocation2 + $0x8] sm:$0xff]
    %v42 = vld [vmem:[#allocation5] sm:$0xff]
    %v43 = vld [vmem:[#allocation5 + $0x8] sm:$0xff]
    %v44 = vand.u32 2147483647, %v40
    %v45 = vand.u32 2147483647, %v41
    %v46 = vsub.f32 0.0, %v44
    %v47 = vsub.f32 0.0, %v45
    %v48 = vmul.f32 %v46, 1.442695
    %v49 = vpow.pop %v48
    %v50 = vmul.f32 %v47, 1.442695
    %v51 = vpow.pop %v50
    %v52 = vmax.f32 %v40, 0.0
    %v53 = vmax.f32 %v41, 0.0
    %v54 = vadd.f32 %v49, 1.0
    %v55 = vlog2.pop %v54
    %v56 = vmul.f32 %v55, 0.6931472
    %v57 = vmul.f32 -0.5, %v49
    %v58 = vadd.f32 %v57, 1.0
    %v59 = vmul.f32 %v58, %v49
    %v60 = vand.u32 2147483647, %v49
    %vm61 = vcmp.lt.f32.partialorder %v60, 0.0004427343
    %v62 = vsel %vm61, %v59, %v56
    %v63 = vadd.f32 %v51, 1.0
    %v64 = vlog2.pop %v63
    %v65 = vmul.f32 %v64, 0.6931472
    %v66 = vmul.f32 -0.5, %v51
    %v67 = vadd.f32 %v66, 1.0
    %v68 = vmul.f32 %v67, %v51
    %v69 = vand.u32 2147483647, %v51
    %vm70 = vcmp.lt.f32.partialorder %v69, 0.0004427343
    %v71 = vsel %vm70, %v68, %v65
    %v72 = vadd.f32 %v52, %v62
    %v73 = vadd.f32 %v53, %v71
    %v74 = vadd.f32 %v49, 1.0
    %v75 = vadd.f32 %v51, 1.0
    %v76 = vrcp.pop %v74
    %v77 = vmul.f32 1.0, %v76
    %v78 = vrcp.pop %v75
    %v79 = vmul.f32 1.0, %v78
    %vm80 = vcmp.ge.f32.partialorder %v40, 0.0
    %vm81 = vcmp.ge.f32.partialorder %v41, 0.0
    %v82 = vsub.f32 1.0, %v77
    %v83 = vsub.f32 1.0, %v79
    %v84 = vsel %vm80, %v77, %v82
    %v85 = vsel %vm81, %v79, %v83
    %v86 = vmul.f32 %v84, %v42
    %v87 = vmul.f32 %v85, %v43
    %v88 = vadd.f32 %v84, %v42
    %v89 = vadd.f32 %v85, %v43
    %v90 = vmul.f32 %v42, %v40
    %v91 = vmul.f32 %v43, %v41
    %v92 = vsub.f32 %v72, %v90
    %v93 = vsub.f32 %v73, %v91
    %v94 = vadd.f32 %v86, %v87
    %v95 = vadd.f32 %v94, 0.0
    %v96 = vadd.f32 %v88, %v89
    %v97 = vadd.f32 %v96, 0.0
    %v98 = vadd.f32 %v92, %v93
    %v99 = vadd.f32 %v98, 0.0
    %100 = vst [vmem:[#allocation7] sm:$0xff] %v95
    %s101 = scalar_lea.vmem [#allocation7], 8
    %102 = vst [vmem:[%s101] sm:$0xff] %v97
    %s103 = scalar_lea.vmem [#allocation7], 16
    %104 = vst [vmem:[%s103] sm:$0xff] %v99
    // Predicated region
    $region18: #{tpu_custom_call.1} parent=1 // pred_check
      _
    $region19: #{tpu_custom_call.1} parent=1 // pred_check_branch
      %106 = sbr.rel (0) target = $region21
    $region20: #{tpu_custom_call.1} parent=1 // pred_region
      %s108 = ssub.s32 384, 384
      %109 = vsyncadd [#allocation4], %s108
      %s110 = sshll.u32 [#allocation7], 4
      %s111 = int_to_ptr.vmem [resolvable:$true] %s110
      %116 = dma.vmem_to_hbm [thread:$0]  %s111, 384, %s2, [#allocation4], 128, 128, 8
    $region21: #{tpu_custom_call.1} parent=1 // pred_fallthru
      _
    // Predicated region
    $region22: #{tpu_custom_call.1} parent=1 // pred_check
      _
    $region23: #{tpu_custom_call.1} parent=1 // pred_check_branch
      %118 = sbr.rel (0) target = $region25
    $region24: #{tpu_custom_call.1} parent=1 // pred_region
      %119 = dma.done [#allocation4], 384
    $region25: #{tpu_custom_call.1} parent=1 // pred_fallthru
      _
    %120 = vsyncpa [#allocation3], 1
    %121 = vsyncpa [#allocation6], 1
    %122 = vsyncpa [#allocation4], 1

</llo_original>
